<compile_context>
chip_gen: v7x
topology: tpu7x:2x2x1
jax: 0.10.0
libtpu: 0.0.40
codegen_flags: <defaults>
</compile_context>

<pallas_src>
import math

import jax
import jax.numpy as jnp
from jax.experimental import pallas as pl
from jax.experimental.pallas import tpu as pltpu

IN_FEATURES = 512
OUT_FEATURES = 2
PAD_OUT = 128        # lane-dense weight width (MXU burns a full pass anyway)
TILE_B_CAP = 4096    # 4096*512*4B = 8 MiB/x-buffer; ~16.6 MiB double-buffered


def _linear_kernel(x_ref, w_ref, b_ref, o_ref):
    # x_ref: (tile_b, 512) f32/bf16, w_ref: (512, 128) f32,
    # b_ref: (1, 2) f32, o_ref: (tile_b, 2) f32
    acc = jnp.dot(x_ref[...], w_ref[...], preferred_element_type=jnp.float32)
    o_ref[...] = (acc[:, :OUT_FEATURES] + b_ref[...]).astype(o_ref.dtype)


def prepare_params(weight, bias):
    """One-time prep: PyTorch weight (2, 512) -> lane-padded (512, 128); bias (2,) -> (1, 2)."""
    w_pad = jnp.zeros((IN_FEATURES, PAD_OUT), jnp.float32)
    w_pad = w_pad.at[:, :OUT_FEATURES].set(weight.T.astype(jnp.float32))
    b_2 = bias.astype(jnp.float32).reshape(1, OUT_FEATURES)
    return w_pad, b_2


@jax.jit
def value_net_forward_prepared(x, w_pad, b_2):
    """x: (B, 512) f32 or bf16, w_pad: (512, 128) f32, b_2: (1, 2) f32 -> (B, 2) f32."""
    B = x.shape[0]

    # Batch tile: aim for >=2 grid steps (v7x megacore sharding), rounded up to
    # the sublane-pack multiple (16 for bf16, 8 for f32), capped for VMEM.
    mult = 16 if x.dtype == jnp.bfloat16 else 8
    tile_b = ((pl.cdiv(B, 2) + mult - 1) // mult) * mult
    tile_b = min(tile_b, TILE_B_CAP)
    if tile_b > B:
        tile_b = B  # single block; legal since it equals the full batch dim
    grid = (pl.cdiv(B, tile_b),)

    cost = pl.CostEstimate(
        flops=2 * B * IN_FEATURES * OUT_FEATURES,   # real useful flops
        transcendentals=0,
        bytes_accessed=(B * IN_FEATURES * x.dtype.itemsize
                        + IN_FEATURES * PAD_OUT * 4
                        + OUT_FEATURES * 4
                        + B * OUT_FEATURES * 4),
    )

    return pl.pallas_call(
        _linear_kernel,
        out_shape=jax.ShapeDtypeStruct((B, OUT_FEATURES), jnp.float32),
        grid=grid,
        in_specs=[
            pl.BlockSpec((tile_b, IN_FEATURES), lambda i: (i, 0)),   # streamed x tiles
            pl.BlockSpec((IN_FEATURES, PAD_OUT), lambda i: (0, 0)),  # resident weight
            pl.BlockSpec((1, OUT_FEATURES), lambda i: (0, 0)),       # resident bias
        ],
        out_specs=pl.BlockSpec((tile_b, OUT_FEATURES), lambda i: (i, 0)),
        compiler_params=pltpu.CompilerParams(
            dimension_semantics=("parallel",),   # megacore sharding on v7x
            vmem_limit_bytes=32 << 20),
        cost_estimate=cost,
    )(x, w_pad, b_2)


def value_net_forward(x, weight, bias, *, small_batch_xla_rows=0):
    """Convenience wrapper taking PyTorch-layout params (2, 512) / (2,).

    If `small_batch_xla_rows > 0` and B is below it, bypass the Pallas kernel
    (launch + pipeline prologue dominate at tiny B) and use plain XLA.
    """
    if x.shape[0] < small_batch_xla_rows:
        return (x.astype(jnp.float32) @ weight.T.astype(jnp.float32)
                + bias.astype(jnp.float32))
    w_pad, b_2 = prepare_params(weight, bias)
    return value_net_forward_prepared(x, w_pad, b_2)


def init_params(key):
    # PyTorch nn.Linear default init: U(-1/sqrt(fan_in), 1/sqrt(fan_in)).
    k_w, k_b = jax.random.split(key)
    bound = 1.0 / math.sqrt(IN_FEATURES)
    weight = jax.random.uniform(
        k_w, (OUT_FEATURES, IN_FEATURES), jnp.float32, -bound, bound)
    bias = jax.random.uniform(
        k_b, (OUT_FEATURES,), jnp.float32, -bound, bound)
    return weight, bias


if __name__ == "__main__":
    key = jax.random.PRNGKey(0)
    k_x, k_p = jax.random.split(key)

    weight, bias = init_params(k_p)
    w_pad, b_2 = prepare_params(weight, bias)   # one-time, outside hot path

    # Small batch: single block (tile_b == B).
    B = 8
    x = jax.random.normal(k_x, (B, IN_FEATURES), dtype=jnp.float32)
    out = jax.block_until_ready(value_net_forward_prepared(x, w_pad, b_2))
    ref = x @ weight.T + bias
    assert out.shape == (B, OUT_FEATURES)
    assert jnp.allclose(out, ref, atol=1e-4, rtol=1e-4)

    # Non-multiple-of-tile batch: 2 grid steps, ragged final block (no jnp.pad).
    B2 = 37
    x2 = jax.random.normal(jax.random.PRNGKey(1), (B2, IN_FEATURES),
                           dtype=jnp.float32)
    out2 = jax.block_until_ready(value_net_forward_prepared(x2, w_pad, b_2))
    ref2 = x2 @ weight.T + bias
    assert out2.shape == (B2, OUT_FEATURES)
    assert jnp.allclose(out2, ref2, atol=1e-4, rtol=1e-4)

    # bf16-streamed x (halves the dominant HBM read), f32 accumulation.
    B3 = 40
    x3 = jax.random.normal(jax.random.PRNGKey(2), (B3, IN_FEATURES),
                           dtype=jnp.float32).astype(jnp.bfloat16)
    out3 = jax.block_until_ready(value_net_forward_prepared(x3, w_pad, b_2))
    ref3 = x3.astype(jnp.float32) @ weight.T + bias
    assert out3.shape == (B3, OUT_FEATURES)
    assert jnp.allclose(out3, ref3, atol=1e-4, rtol=1e-4)

    print("KERNEL_OK")
</pallas_src>

<mosaic_0001>
module attributes {stable_mosaic.version = 11 : i64} {
  func.func @_linear_kernel(%arg0: i32, %arg1: memref<8x512xf32, #tpu.memory_space<vmem>>, %arg2: memref<512x128xf32, #tpu.memory_space<vmem>>, %arg3: memref<1x2xf32, #tpu.memory_space<vmem>>, %arg4: memref<8x2xf32, #tpu.memory_space<vmem>>) attributes {dimension_semantics = [#tpu.dimension_semantics<parallel>], iteration_bounds = array<i64: 1>, scalar_prefetch = 0 : i64, scratch_operands = 0 : i64, tpu.core_type = #tpu.core_type<tc>, window_params = [{transform_indices = @transform_0, window_bounds = array<i64: 8, 512>}, {pipeline_mode = #tpu.pipeline_mode<synchronous>, transform_indices = @transform_1, window_bounds = array<i64: 512, 128>}, {pipeline_mode = #tpu.pipeline_mode<synchronous>, transform_indices = @transform_2, window_bounds = array<i64: 1, 2>}, {transform_indices = @transform_3, window_bounds = array<i64: 8, 2>}]} {
    %c0 = arith.constant 0 : index
    %c0_0 = arith.constant 0 : index
    %0 = vector.load %arg1[%c0, %c0_0] : memref<8x512xf32, #tpu.memory_space<vmem>>, vector<8x512xf32>
    %c0_1 = arith.constant 0 : index
    %c0_2 = arith.constant 0 : index
    %1 = vector.load %arg2[%c0_1, %c0_2] : memref<512x128xf32, #tpu.memory_space<vmem>>, vector<512x128xf32>
    %cst = arith.constant dense<0.000000e+00> : vector<8x128xf32>
    %2 = tpu.matmul %0, %1, %cst {dimension_numbers = #tpu.dot_dimension_numbers<[1], [0], [0], [1], [0, 0, 1, 1], [], []>} : vector<8x512xf32>, vector<512x128xf32>, vector<8x128xf32> -> vector<8x128xf32>
    %3 = vector.extract_strided_slice %2 {offsets = [0, 0], sizes = [8, 2], strides = [1, 1]} : vector<8x128xf32> to vector<8x2xf32>
    %c0_3 = arith.constant 0 : index
    %c0_4 = arith.constant 0 : index
    %4 = vector.load %arg3[%c0_3, %c0_4] : memref<1x2xf32, #tpu.memory_space<vmem>>, vector<1x2xf32>
    %5 = vector.broadcast %4 : vector<1x2xf32> to vector<8x2xf32>
    %6 = arith.addf %3, %5 : vector<8x2xf32>
    %c0_5 = arith.constant 0 : index
    %c0_6 = arith.constant 0 : index
    %7 = vector.load %arg4[%c0_5, %c0_6] : memref<8x2xf32, #tpu.memory_space<vmem>>, vector<8x2xf32>
    tpu.vector_store %arg4[%c0_5, %c0_6], %6 {strides = array<i32>} : memref<8x2xf32, #tpu.memory_space<vmem>>, vector<8x2xf32>,
    return
  }
  func.func @transform_0(%arg0: i32) -> (i32, i32) {
    %c0_i32 = arith.constant 0 : i32
    %c0_i32_0 = arith.constant 0 : i32
    return %arg0, %c0_i32 : i32, i32
  }
  func.func @transform_1(%arg0: i32) -> (i32, i32) {
    %c0_i32 = arith.constant 0 : i32
    %c0_i32_0 = arith.constant 0 : i32
    %c0_i32_1 = arith.constant 0 : i32
    return %c0_i32, %c0_i32_0 : i32, i32
  }
  func.func @transform_2(%arg0: i32) -> (i32, i32) {
    %c0_i32 = arith.constant 0 : i32
    %c0_i32_0 = arith.constant 0 : i32
    %c0_i32_1 = arith.constant 0 : i32
    return %c0_i32, %c0_i32_0 : i32, i32
  }
  func.func @transform_3(%arg0: i32) -> (i32, i32) {
    %c0_i32 = arith.constant 0 : i32
    %c0_i32_0 = arith.constant 0 : i32
    return %arg0, %c0_i32 : i32, i32
  }
}

</mosaic_0001>

<llo_original>
// kernel: value_net_forward_prepared.1
$region0: #{value_net_forward_prepared.1}
  #allocation0 [shape = 'u32[]', space=smem, size = 0x4, offset = 0x4, fixed_abs, tag = 'smem constant byte address 0x4 - core index']
  #allocation1 [shape = 'u32[144,128]{1,0:T(1,128)}', space=vmem, size = 0x12000, scoped, tag = 'internal scratch']
  %s0 = inlined_call_operand.hbm [shape: f32[8,512], index: 0, kind: input, shape index: {}]
  %s1 = inlined_call_operand.hbm [shape: f32[512,128], index: 1, kind: input, shape index: {}]
  %s2 = inlined_call_operand.vmem [shape: f32[1,2], index: 2, kind: input, shape index: {}]
  %s3 = inlined_call_operand.vmem [shape: f32[8,2], index: 3, kind: output, shape index: {}]
  %s4 = sld [smem:[#allocation0]]
  $region30: #{value_net_forward_prepared.1} parent=0
    _
  %s6 = ssub.s32 1, %s4
  %s7 = scalar_select 0, %s6, %s4
  $region1: #{value_net_forward_prepared.1} parent=0
    #allocation2 [shape = 'u8[16384]{0}', space=vmem, size = 0x4000, scoped, tag = 'input window, operand 0, single buffered']
    #allocation3 [shape = 's32[1]{0}', space=sflag, size = 0x4, scoped, tag = 'scoped memory for value_net_forward_prepared.1']
    #allocation4 [shape = 'u8[262144]{0}', space=vmem, size = 0x40000, scoped, tag = 'input window, operand 1, single buffered']
    #allocation5 [shape = 's32[1]{0}', space=sflag, size = 0x4, scoped, tag = 'scoped memory for value_net_forward_prepared.1']
    %8 = vsyncpa [#allocation3], 0
    %9 = vsyncpa [#allocation5], 0
    // Predicated region
    $region2: #{value_net_forward_prepared.1} parent=1 // pred_check
      _
    $region3: #{value_net_forward_prepared.1} parent=1 // pred_check_branch
      %11 = sbr.rel (0) target = $region5
    $region4: #{value_net_forward_prepared.1} parent=1 // pred_region
      %s13 = ssub.s32 512, 512
      %14 = vsyncadd [#allocation3], %s13
      %s16 = sshll.u32 [#allocation2], 4
      %s17 = int_to_ptr.vmem [resolvable:$true] %s16
      %19 = dma.hbm_to_vmem [thread:$0]  %s0, 512, %s17, [#allocation3]
    $region5: #{value_net_forward_prepared.1} parent=1 // pred_fallthru
      _
    // Predicated region
    $region6: #{value_net_forward_prepared.1} parent=1 // pred_check
      _
    $region7: #{value_net_forward_prepared.1} parent=1 // pred_check_branch
      %21 = sbr.rel (0) target = $region9
    $region8: #{value_net_forward_prepared.1} parent=1 // pred_region
      %s23 = ssub.s32 8192, 8192
      %24 = vsyncadd [#allocation5], %s23
      %s25 = sshll.u32 [#allocation4], 4
      %s26 = int_to_ptr.vmem [resolvable:$true] %s25
      %31 = dma.hbm_to_vmem [thread:$0]  %s1, 8192, %s26, [#allocation5], 128, 128, 8
    $region9: #{value_net_forward_prepared.1} parent=1 // pred_fallthru
      _
    // Predicated region
    $region10: #{value_net_forward_prepared.1} parent=1 // pred_check
      _
    $region11: #{value_net_forward_prepared.1} parent=1 // pred_check_branch
      %33 = sbr.rel (0) target = $region13
    $region12: #{value_net_forward_prepared.1} parent=1 // pred_region
      _
    $region13: #{value_net_forward_prepared.1} parent=1 // pred_fallthru
      _
    // Predicated region
    $region14: #{value_net_forward_prepared.1} parent=1 // pred_check
      _
    $region15: #{value_net_forward_prepared.1} parent=1 // pred_check_branch
      %35 = sbr.rel (0) target = $region17
    $region16: #{value_net_forward_prepared.1} parent=1 // pred_region
      %36 = dma.done [#allocation3], 512
    $region17: #{value_net_forward_prepared.1} parent=1 // pred_fallthru
      _
    // Predicated region
    $region18: #{value_net_forward_prepared.1} parent=1 // pred_check
      _
    $region19: #{value_net_forward_prepared.1} parent=1 // pred_check_branch
      %38 = sbr.rel (0) target = $region21
    $region20: #{value_net_forward_prepared.1} parent=1 // pred_region
      %39 = dma.done [#allocation5], 8192
    $region21: #{value_net_forward_prepared.1} parent=1 // pred_fallthru
      _
    %v40 = vld [vmem:[#allocation2] sm:$0xff]
    %v41 = vld [vmem:[#allocation2 + $0x8] sm:$0xff]
    %v42 = vld [vmem:[#allocation2 + $0x10] sm:$0xff]
    %v43 = vld [vmem:[#allocation2 + $0x18] sm:$0xff]
    %v44 = vld [vmem:[#allocation4] sm:$0xff]
    %v45 = vld [vmem:[#allocation4 + $0x8] sm:$0xff]
    %v46 = vld [vmem:[#allocation4 + $0x10] sm:$0xff]
    %v47 = vld [vmem:[#allocation4 + $0x18] sm:$0xff]
    %v48 = vld [vmem:[#allocation4 + $0x20] sm:$0xff]
    %v49 = vld [vmem:[#allocation4 + $0x28] sm:$0xff]
    %v50 = vld [vmem:[#allocation4 + $0x30] sm:$0xff]
    %v51 = vld [vmem:[#allocation4 + $0x38] sm:$0xff]
    %v52 = vld [vmem:[#allocation4 + $0x40] sm:$0xff]
    %v53 = vld [vmem:[#allocation4 + $0x48] sm:$0xff]
    %v54 = vld [vmem:[#allocation4 + $0x50] sm:$0xff]
    %v55 = vld [vmem:[#allocation4 + $0x58] sm:$0xff]
    %v56 = vld [vmem:[#allocation4 + $0x60] sm:$0xff]
    %v57 = vld [vmem:[#allocation4 + $0x68] sm:$0xff]
    %v58 = vld [vmem:[#allocation4 + $0x70] sm:$0xff]
    %v59 = vld [vmem:[#allocation4 + $0x78] sm:$0xff]
    %v60 = vld [vmem:[#allocation4 + $0x80] sm:$0xff]
    %v61 = vld [vmem:[#allocation4 + $0x88] sm:$0xff]
    %v62 = vld [vmem:[#allocation4 + $0x90] sm:$0xff]
    %v63 = vld [vmem:[#allocation4 + $0x98] sm:$0xff]
    %v64 = vld [vmem:[#allocation4 + $0xa0] sm:$0xff]
    %v65 = vld [vmem:[#allocation4 + $0xa8] sm:$0xff]
    %v66 = vld [vmem:[#allocation4 + $0xb0] sm:$0xff]
    %v67 = vld [vmem:[#allocation4 + $0xb8] sm:$0xff]
    %v68 = vld [vmem:[#allocation4 + $0xc0] sm:$0xff]
    %v69 = vld [vmem:[#allocation4 + $0xc8] sm:$0xff]
    %v70 = vld [vmem:[#allocation4 + $0xd0] sm:$0xff]
    %v71 = vld [vmem:[#allocation4 + $0xd8] sm:$0xff]
    %v72 = vld [vmem:[#allocation4 + $0xe0] sm:$0xff]
    %v73 = vld [vmem:[#allocation4 + $0xe8] sm:$0xff]
    %v74 = vld [vmem:[#allocation4 + $0xf0] sm:$0xff]
    %v75 = vld [vmem:[#allocation4 + $0xf8] sm:$0xff]
    %v76 = vld [vmem:[#allocation4 + $0x100] sm:$0xff]
    %v77 = vld [vmem:[#allocation4 + $0x108] sm:$0xff]
    %v78 = vld [vmem:[#allocation4 + $0x110] sm:$0xff]
    %v79 = vld [vmem:[#allocation4 + $0x118] sm:$0xff]
    %v80 = vld [vmem:[#allocation4 + $0x120] sm:$0xff]
    %v81 = vld [vmem:[#allocation4 + $0x128] sm:$0xff]
    %v82 = vld [vmem:[#allocation4 + $0x130] sm:$0xff]
    %v83 = vld [vmem:[#allocation4 + $0x138] sm:$0xff]
    %v84 = vld [vmem:[#allocation4 + $0x140] sm:$0xff]
    %v85 = vld [vmem:[#allocation4 + $0x148] sm:$0xff]
    %v86 = vld [vmem:[#allocation4 + $0x150] sm:$0xff]
    %v87 = vld [vmem:[#allocation4 + $0x158] sm:$0xff]
    %v88 = vld [vmem:[#allocation4 + $0x160] sm:$0xff]
    %v89 = vld [vmem:[#allocation4 + $0x168] sm:$0xff]
    %v90 = vld [vmem:[#allocation4 + $0x170] sm:$0xff]
    %v91 = vld [vmem:[#allocation4 + $0x178] sm:$0xff]
    %v92 = vld [vmem:[#allocation4 + $0x180] sm:$0xff]
    %v93 = vld [vmem:[#allocation4 + $0x188] sm:$0xff]
    %v94 = vld [vmem:[#allocation4 + $0x190] sm:$0xff]
    %v95 = vld [vmem:[#allocation4 + $0x198] sm:$0xff]
    %v96 = vld [vmem:[#allocation4 + $0x1a0] sm:$0xff]
    %v97 = vld [vmem:[#allocation4 + $0x1a8] sm:$0xff]
    %v98 = vld [vmem:[#allocation4 + $0x1b0] sm:$0xff]
    %v99 = vld [vmem:[#allocation4 + $0x1b8] sm:$0xff]
    %v100 = vld [vmem:[#allocation4 + $0x1c0] sm:$0xff]
    %v101 = vld [vmem:[#allocation4 + $0x1c8] sm:$0xff]
    %v102 = vld [vmem:[#allocation4 + $0x1d0] sm:$0xff]
    %v103 = vld [vmem:[#allocation4 + $0x1d8] sm:$0xff]
    %v104 = vld [vmem:[#allocation4 + $0x1e0] sm:$0xff]
    %v105 = vld [vmem:[#allocation4 + $0x1e8] sm:$0xff]
    %v106 = vld [vmem:[#allocation4 + $0x1f0] sm:$0xff]
    %v107 = vld [vmem:[#allocation4 + $0x1f8] sm:$0xff]
    %108 = vmatprep.subr.mxu0 0.0
    %109 = vmatpush1.msra.mxu0 %v44
    %110 = vmatprep.subr.mxu0 0.0
    %111 = vmatpush1.msra.mxu0 %v45
    %112 = vmatprep.subr.mxu0 0.0
    %113 = vmatpush1.msra.mxu0 %v46
    %114 = vmatprep.subr.mxu0 0.0
    %115 = vmatpush1.msra.mxu0 %v47
    %116 = vmatprep.subr.mxu0 0.0
    %117 = vmatpush1.msra.mxu0 %v48
    %118 = vmatprep.subr.mxu0 0.0
    %119 = vmatpush1.msra.mxu0 %v49
    %120 = vmatprep.subr.mxu0 0.0
    %121 = vmatpush1.msra.mxu0 %v50
    %122 = vmatprep.subr.mxu0 0.0
    %123 = vmatpush1.msra.mxu0 %v51
    %124 = vmatprep.subr.mxu0 0.0
    %125 = vmatpush1.msra.mxu0 %v52
    %126 = vmatprep.subr.mxu0 0.0
    %127 = vmatpush1.msra.mxu0 %v53
    %128 = vmatprep.subr.mxu0 0.0
    %129 = vmatpush1.msra.mxu0 %v54
    %130 = vmatprep.subr.mxu0 0.0
    %131 = vmatpush1.msra.mxu0 %v55
    %132 = vmatprep.subr.mxu0 0.0
    %133 = vmatpush1.msra.mxu0 %v56
    %134 = vmatprep.subr.mxu0 0.0
    %135 = vmatpush1.msra.mxu0 %v57
    %136 = vmatprep.subr.mxu0 0.0
    %137 = vmatpush1.msra.mxu0 %v58
    %138 = vmatprep.subr.mxu0 0.0
    %139 = vmatpush1.msra.mxu0 %v59
    %140 = vmatprep.subr.mxu0 0.0
    %141 = vmatpush1.msra.mxu0 %v60
    %142 = vmatprep.subr.mxu0 0.0
    %143 = vmatpush1.msra.mxu0 %v61
    %144 = vmatprep.subr.mxu0 0.0
    %145 = vmatpush1.msra.mxu0 %v62
    %146 = vmatprep.subr.mxu0 0.0
    %147 = vmatpush1.msra.mxu0 %v63
    %148 = vmatprep.subr.mxu0 0.0
    %149 = vmatpush1.msra.mxu0 %v64
    %150 = vmatprep.subr.mxu0 0.0
    %151 = vmatpush1.msra.mxu0 %v65
    %152 = vmatprep.subr.mxu0 0.0
    %153 = vmatpush1.msra.mxu0 %v66
    %154 = vmatprep.subr.mxu0 0.0
    %155 = vmatpush1.msra.mxu0 %v67
    %156 = vmatprep.subr.mxu0 0.0
    %157 = vmatpush1.msra.mxu0 %v68
    %158 = vmatprep.subr.mxu0 0.0
    %159 = vmatpush1.msra.mxu0 %v69
    %160 = vmatprep.subr.mxu0 0.0
    %161 = vmatpush1.msra.mxu0 %v70
    %162 = vmatprep.subr.mxu0 0.0
    %163 = vmatpush1.msra.mxu0 %v71
    %164 = vmatprep.subr.mxu0 0.0
    %165 = vmatpush1.msra.mxu0 %v72
    %166 = vmatprep.subr.mxu0 0.0
    %167 = vmatpush1.msra.mxu0 %v73
    %168 = vmatprep.subr.mxu0 0.0
    %169 = vmatpush1.msra.mxu0 %v74
    %170 = vmatprep.subr.mxu0 0.0
    %171 = vmatpush1.msra.mxu0 %v75
    %172 = vmatprep.mubr.f32.mxu0 %v41
    %173 = vmatmul.mubr.f32.gmra.mrb[0].mxu0 %v40
    %v174 = vpop.f32.mrb[0].mxu0
    %v175 = vadd.f32 0.0, %v174
    %v176 = vpop.f32.mrb[0].mxu0
    %177 = vdwg.mxu0
    %178 = vmatprep.subr.mxu0 0.0
    %179 = vmatpush1.msra.mxu0 %v76
    %180 = vmatprep.subr.mxu0 0.0
    %181 = vmatpush1.msra.mxu0 %v77
    %182 = vmatprep.subr.mxu0 0.0
    %183 = vmatpush1.msra.mxu0 %v78
    %184 = vmatprep.subr.mxu0 0.0
    %185 = vmatpush1.msra.mxu0 %v79
    %186 = vmatprep.subr.mxu0 0.0
    %187 = vmatpush1.msra.mxu0 %v80
    %188 = vmatprep.subr.mxu0 0.0
    %189 = vmatpush1.msra.mxu0 %v81
    %190 = vmatprep.subr.mxu0 0.0
    %191 = vmatpush1.msra.mxu0 %v82
    %192 = vmatprep.subr.mxu0 0.0
    %193 = vmatpush1.msra.mxu0 %v83
    %194 = vmatprep.subr.mxu0 0.0
    %195 = vmatpush1.msra.mxu0 %v84
    %196 = vmatprep.subr.mxu0 0.0
    %197 = vmatpush1.msra.mxu0 %v85
    %198 = vmatprep.subr.mxu0 0.0
    %199 = vmatpush1.msra.mxu0 %v86
    %200 = vmatprep.subr.mxu0 0.0
    %201 = vmatpush1.msra.mxu0 %v87
    %202 = vmatprep.subr.mxu0 0.0
    %203 = vmatpush1.msra.mxu0 %v88
    %204 = vmatprep.subr.mxu0 0.0
    %205 = vmatpush1.msra.mxu0 %v89
    %206 = vmatprep.subr.mxu0 0.0
    %207 = vmatpush1.msra.mxu0 %v90
    %208 = vmatprep.subr.mxu0 0.0
    %209 = vmatpush1.msra.mxu0 %v91
    %210 = vmatprep.subr.mxu0 0.0
    %211 = vmatpush1.msra.mxu0 %v92
    %212 = vmatprep.subr.mxu0 0.0
    %213 = vmatpush1.msra.mxu0 %v93
    %214 = vmatprep.subr.mxu0 0.0
    %215 = vmatpush1.msra.mxu0 %v94
    %216 = vmatprep.subr.mxu0 0.0
    %217 = vmatpush1.msra.mxu0 %v95
    %218 = vmatprep.subr.mxu0 0.0
    %219 = vmatpush1.msra.mxu0 %v96
    %220 = vmatprep.subr.mxu0 0.0
    %221 = vmatpush1.msra.mxu0 %v97
    %222 = vmatprep.subr.mxu0 0.0
    %223 = vmatpush1.msra.mxu0 %v98
    %224 = vmatprep.subr.mxu0 0.0
    %225 = vmatpush1.msra.mxu0 %v99
    %226 = vmatprep.subr.mxu0 0.0
    %227 = vmatpush1.msra.mxu0 %v100
    %228 = vmatprep.subr.mxu0 0.0
    %229 = vmatpush1.msra.mxu0 %v101
    %230 = vmatprep.subr.mxu0 0.0
    %231 = vmatpush1.msra.mxu0 %v102
    %232 = vmatprep.subr.mxu0 0.0
    %233 = vmatpush1.msra.mxu0 %v103
    %234 = vmatprep.subr.mxu0 0.0
    %235 = vmatpush1.msra.mxu0 %v104
    %236 = vmatprep.subr.mxu0 0.0
    %237 = vmatpush1.msra.mxu0 %v105
    %238 = vmatprep.subr.mxu0 0.0
    %239 = vmatpush1.msra.mxu0 %v106
    %240 = vmatprep.subr.mxu0 0.0
    %241 = vmatpush1.msra.mxu0 %v107
    %242 = vmatprep.mubr.f32.mxu0 %v43
    %243 = vmatmul.mubr.f32.gmra.mrb[0].mxu0 %v42
    %v244 = vpop.f32.mrb[0].mxu0
    %v245 = vadd.f32 %v175, %v244
    %v246 = vpop.f32.mrb[0].mxu0
    %247 = vdwg.mxu0
    %v248 = vld [vmem:[%s2] sm:$0x1]
    %v250 = vlaneseq
    %v251 = vshrl.u32 %v250, 7
    %v252 = vsub.s32 0, %v251
    %v253 = vrot.slane %v248, %v252
    %v255 = vadd.f32 %v245, %v253
    %vm256 = vcmask 15360
    %257 = vst.msk [vmem:[%s3] sm:$0xff] %vm256, %v255
    // Predicated region
    $region22: #{value_net_forward_prepared.1} parent=1 // pred_check
      _
    $region23: #{value_net_forward_prepared.1} parent=1 // pred_check_branch
      %259 = sbr.rel (0) target = $region25
    $region24: #{value_net_forward_prepared.1} parent=1 // pred_region
      _
    $region25: #{value_net_forward_prepared.1} parent=1 // pred_fallthru
      _
    // Predicated region
    $region26: #{value_net_forward_prepared.1} parent=1 // pred_check
      _
    $region27: #{value_net_forward_prepared.1} parent=1 // pred_check_branch
      %261 = sbr.rel (0) target = $region29
    $region28: #{value_net_forward_prepared.1} parent=1 // pred_region
      _
    $region29: #{value_net_forward_prepared.1} parent=1 // pred_fallthru
      _
    %262 = vsyncpa [#allocation3], 1
    %263 = vsyncpa [#allocation5], 1

</llo_original>
